<compile_context>
chip_gen: v7x
topology: tpu7x:2x2x1
jax: 0.10.0
libtpu: 0.0.40
codegen_flags: <defaults>
</compile_context>

<pallas_src>
import math

import jax
import jax.numpy as jnp
from jax import lax
from jax.experimental import pallas as pl
from jax.experimental.pallas import tpu as pltpu


def _arc_margin_kernel(f_ref, w_ref, winv_ref, o_ref):
    # f_ref:    (tm, D)  features already scaled by 1/||f|| (native dtype)
    # w_ref:    (tn, D)  raw weight rows (native dtype)
    # winv_ref: (1, tn)  f32 per-class 1/||w||
    acc = lax.dot_general(
        f_ref[...], w_ref[...],
        dimension_numbers=(((1,), (1,)), ((), ())),   # contract last dims, no transpose
        preferred_element_type=jnp.float32,
    )                                                 # (tm, tn) f32
    o_ref[...] = (acc * winv_ref[...]).astype(o_ref.dtype)


def _round_down(x: int, m: int) -> int:
    return x // m * m


def _vmem_capacity_bytes() -> int:
    try:
        info = pltpu.get_tpu_info()
        cap = getattr(info, "vmem_capacity_bytes", None)
        if cap:
            return int(cap)
    except Exception:
        pass
    return 64 << 20   # conservative fallback: v7x physical VMEM


def arc_margin_product(features: jax.Array, weight: jax.Array,
                       *, tm_max: int = 512, tn_max: int = 1024,
                       out_dtype=jnp.float32) -> jax.Array:
    """features: (B, in_features), weight: (out_features, in_features) -> (B, out_features)."""
    B, D = features.shape
    C, D2 = weight.shape
    assert D == D2, "in_features mismatch"

    f32 = jnp.float32
    eps2 = jnp.float32(1e-24)   # (1e-12)^2; rsqrt(max(sumsq, eps^2)) == 1/max(norm, 1e-12) in f32

    # ---- Hoisted normalization (one cheap XLA pass, not per-tile work) ----
    f_sq = jnp.sum(features.astype(f32) * features.astype(f32), axis=1, keepdims=True)
    f_n = (features.astype(f32) * lax.rsqrt(jnp.maximum(f_sq, eps2))).astype(weight.dtype)

    w_sq = jnp.sum(weight.astype(f32) * weight.astype(f32), axis=1)
    w_inv = lax.rsqrt(jnp.maximum(w_sq, eps2)).reshape(1, C)          # (1, C) f32

    # ---- Tile selection against the real chip VMEM budget ----
    # Full-extent blocks for small dims (no padding, no partial tiles);
    # 8/128-multiple tiles + cdiv grid with masked boundary tiles otherwise.
    tm = B if B <= tm_max else tm_max          # tm_max is a multiple of 8
    tn = C if C <= tn_max else tn_max          # tn_max is a multiple of 128

    w_it = jnp.dtype(weight.dtype).itemsize
    out_it = jnp.dtype(out_dtype).itemsize

    def footprint(tm_, tn_):
        return (2 * tm_ * D * w_it             # double-buffered feature tiles (cast to weight dtype)
                + 2 * tn_ * D * w_it           # double-buffered weight tiles
                + 2 * tn_ * 4                  # double-buffered w_inv tiles
                + 2 * tm_ * tn_ * out_it       # double-buffered output tiles
                + tm_ * tn_ * 4)               # f32 matmul accumulator temporary

    vmem_cap = _vmem_capacity_bytes()
    budget = int(vmem_cap * 0.7)               # leave headroom for Mosaic internal scratch
    while footprint(tm, tn) > budget:
        if tn > 128:
            tn = max(128, _round_down(tn // 2, 128))
        elif tm > 8:
            tm = max(8, _round_down(tm // 2, 8))
        else:
            break

    grid = (pl.cdiv(C, tn), pl.cdiv(B, tm))    # class axis OUTERMOST, batch innermost

    vmem_limit = int(min(max(int(1.5 * footprint(tm, tn)), 32 << 20),
                         vmem_cap - (8 << 20)))

    out = pl.pallas_call(
        _arc_margin_kernel,
        out_shape=jax.ShapeDtypeStruct((B, C), out_dtype),
        grid=grid,
        in_specs=[
            pl.BlockSpec((tm, D), lambda ci, bi: (bi, 0)),   # feature tile: varies with inner axis
            pl.BlockSpec((tn, D), lambda ci, bi: (ci, 0)),   # weight tile: resident across inner axis
            pl.BlockSpec((1, tn), lambda ci, bi: (0, ci)),   # per-class 1/||w|| row
        ],
        out_specs=pl.BlockSpec((tm, tn), lambda ci, bi: (bi, ci)),
        compiler_params=pltpu.CompilerParams(
            dimension_semantics=("parallel", "parallel"),
            vmem_limit_bytes=vmem_limit,
        ),
    )(f_n, weight, w_inv)

    return out


def xavier_uniform(key, out_features, in_features, dtype=jnp.float32):
    # nn.init.xavier_uniform_: U(-a, a), a = sqrt(6 / (fan_in + fan_out))
    bound = math.sqrt(6.0 / (in_features + out_features))
    return jax.random.uniform(
        key, (out_features, in_features), dtype=dtype, minval=-bound, maxval=bound
    )


if __name__ == "__main__":
    in_features = 32
    out_features = 16
    batch = 8

    key = jax.random.PRNGKey(0)
    k_feat, k_w = jax.random.split(key)

    features = jax.random.normal(k_feat, (batch, in_features), dtype=jnp.float32)
    weight = xavier_uniform(k_w, out_features, in_features)

    cosine = arc_margin_product(features, weight)
    cosine = jax.block_until_ready(cosine)

    # Reference check in plain JAX (same math as the PyTorch forward).
    def ref(f, w, eps=1e-12):
        f_n = f / jnp.maximum(jnp.linalg.norm(f, axis=1, keepdims=True), eps)
        w_n = w / jnp.maximum(jnp.linalg.norm(w, axis=1, keepdims=True), eps)
        return f_n @ w_n.T

    expected = ref(features, weight)
    assert cosine.shape == (batch, out_features)
    assert jnp.allclose(cosine, expected, atol=1e-5, rtol=1e-5), "mismatch vs reference"

    print("KERNEL_OK")
</pallas_src>

<mosaic_0001>
module attributes {stable_mosaic.version = 11 : i64} {
  func.func @_arc_margin_kernel(%arg0: i32, %arg1: i32, %arg2: memref<8x32xf32, #tpu.memory_space<vmem>>, %arg3: memref<16x32xf32, #tpu.memory_space<vmem>>, %arg4: memref<1x16xf32, #tpu.memory_space<vmem>>, %arg5: memref<8x16xf32, #tpu.memory_space<vmem>>) attributes {dimension_semantics = [#tpu.dimension_semantics<parallel>, #tpu.dimension_semantics<parallel>], iteration_bounds = array<i64: 1, 1>, scalar_prefetch = 0 : i64, scratch_operands = 0 : i64, tpu.core_type = #tpu.core_type<tc>, window_params = [{transform_indices = @transform_0, window_bounds = array<i64: 8, 32>}, {transform_indices = @transform_1, window_bounds = array<i64: 16, 32>}, {transform_indices = @transform_2, window_bounds = array<i64: 1, 16>}, {transform_indices = @transform_3, window_bounds = array<i64: 8, 16>}]} {
    %c0 = arith.constant 0 : index
    %c0_0 = arith.constant 0 : index
    %0 = vector.load %arg2[%c0, %c0_0] : memref<8x32xf32, #tpu.memory_space<vmem>>, vector<8x32xf32>
    %c0_1 = arith.constant 0 : index
    %c0_2 = arith.constant 0 : index
    %1 = vector.load %arg3[%c0_1, %c0_2] : memref<16x32xf32, #tpu.memory_space<vmem>>, vector<16x32xf32>
    %cst = arith.constant dense<0.000000e+00> : vector<8x16xf32>
    %2 = tpu.matmul %0, %1, %cst {dimension_numbers = #tpu.dot_dimension_numbers<[1], [1], [0], [0], [0, 0, 1, 0], [], []>} : vector<8x32xf32>, vector<16x32xf32>, vector<8x16xf32> -> vector<8x16xf32>
    %c0_3 = arith.constant 0 : index
    %c0_4 = arith.constant 0 : index
    %3 = vector.load %arg4[%c0_3, %c0_4] : memref<1x16xf32, #tpu.memory_space<vmem>>, vector<1x16xf32>
    %4 = vector.broadcast %3 : vector<1x16xf32> to vector<8x16xf32>
    %5 = arith.mulf %2, %4 : vector<8x16xf32>
    %c0_5 = arith.constant 0 : index
    %c0_6 = arith.constant 0 : index
    %6 = vector.load %arg5[%c0_5, %c0_6] : memref<8x16xf32, #tpu.memory_space<vmem>>, vector<8x16xf32>
    tpu.vector_store %arg5[%c0_5, %c0_6], %5 {strides = array<i32>} : memref<8x16xf32, #tpu.memory_space<vmem>>, vector<8x16xf32>,
    return
  }
  func.func @transform_0(%arg0: i32, %arg1: i32) -> (i32, i32) {
    %c0_i32 = arith.constant 0 : i32
    %c0_i32_0 = arith.constant 0 : i32
    return %arg1, %c0_i32 : i32, i32
  }
  func.func @transform_1(%arg0: i32, %arg1: i32) -> (i32, i32) {
    %c0_i32 = arith.constant 0 : i32
    %c0_i32_0 = arith.constant 0 : i32
    return %arg0, %c0_i32 : i32, i32
  }
  func.func @transform_2(%arg0: i32, %arg1: i32) -> (i32, i32) {
    %c0_i32 = arith.constant 0 : i32
    %c0_i32_0 = arith.constant 0 : i32
    return %c0_i32, %arg0 : i32, i32
  }
  func.func @transform_3(%arg0: i32, %arg1: i32) -> (i32, i32) {
    %c0_i32 = arith.constant 0 : i32
    return %arg1, %arg0 : i32, i32
  }
}

</mosaic_0001>

<llo_original>
// kernel: tpu_custom_call.1
$region0: #{tpu_custom_call.1}
  #allocation0 [shape = 'u32[]', space=smem, size = 0x4, offset = 0x4, fixed_abs, tag = 'smem constant byte address 0x4 - core index']
  #allocation1 [shape = 'u32[144,128]{1,0:T(1,128)}', space=vmem, size = 0x12000, scoped, tag = 'internal scratch']
  %s0 = inlined_call_operand.hbm [shape: f32[8,32], index: 0, kind: input, shape index: {}]
  %s1 = inlined_call_operand.hbm [shape: f32[16,32], index: 1, kind: input, shape index: {}]
  %s2 = inlined_call_operand.vmem [shape: f32[1,16], index: 2, kind: input, shape index: {}]
  %s3 = inlined_call_operand.hbm [shape: f32[8,16], index: 3, kind: output, shape index: {}]
  %s4 = sld [smem:[#allocation0]]
  $region30: #{tpu_custom_call.1} parent=0
    _
  %s6 = ssub.s32 1, %s4
  %s7 = scalar_select 0, %s6, %s4
  $region1: #{tpu_custom_call.1} parent=0
    #allocation2 [shape = 'u8[4096]{0}', space=vmem, size = 0x1000, scoped, tag = 'input window, operand 0, single buffered']
    #allocation3 [shape = 's32[1]{0}', space=sflag, size = 0x4, scoped, tag = 'scoped memory for tpu_custom_call.1']
    #allocation4 [shape = 's32[1]{0}', space=sflag, size = 0x4, scoped, tag = 'scoped memory for tpu_custom_call.1']
    #allocation5 [shape = 'u8[8192]{0}', space=vmem, size = 0x2000, scoped, tag = 'input window, operand 1, single buffered']
    #allocation6 [shape = 's32[1]{0}', space=sflag, size = 0x4, scoped, tag = 'scoped memory for tpu_custom_call.1']
    #allocation7 [shape = 'u8[4096]{0}', space=vmem, size = 0x1000, scoped, tag = 'output window, operand 0, single buffered']
    %8 = vsyncpa [#allocation3], 0
    %9 = vsyncpa [#allocation6], 0
    %10 = vsyncpa [#allocation4], 0
    // Predicated region
    $region2: #{tpu_custom_call.1} parent=1 // pred_check
      _
    $region3: #{tpu_custom_call.1} parent=1 // pred_check_branch
      %12 = sbr.rel (0) target = $region5
    $region4: #{tpu_custom_call.1} parent=1 // pred_region
      %s14 = ssub.s32 128, 128
      %15 = vsyncadd [#allocation3], %s14
      %s17 = sshll.u32 [#allocation2], 4
      %s18 = int_to_ptr.vmem [resolvable:$true] %s17
      %20 = dma.hbm_to_vmem [thread:$0]  %s0, 128, %s18, [#allocation3]
    $region5: #{tpu_custom_call.1} parent=1 // pred_fallthru
      _
    // Predicated region
    $region6: #{tpu_custom_call.1} parent=1 // pred_check
      _
    $region7: #{tpu_custom_call.1} parent=1 // pred_check_branch
      %22 = sbr.rel (0) target = $region9
    $region8: #{tpu_custom_call.1} parent=1 // pred_region
      %s24 = ssub.s32 256, 256
      %25 = vsyncadd [#allocation6], %s24
      %s26 = sshll.u32 [#allocation5], 4
      %s27 = int_to_ptr.vmem [resolvable:$true] %s26
      %32 = dma.hbm_to_vmem [thread:$0]  %s1, 256, %s27, [#allocation6], 128, 128, 8
    $region9: #{tpu_custom_call.1} parent=1 // pred_fallthru
      _
    // Predicated region
    $region10: #{tpu_custom_call.1} parent=1 // pred_check
      _
    $region11: #{tpu_custom_call.1} parent=1 // pred_check_branch
      %34 = sbr.rel (0) target = $region13
    $region12: #{tpu_custom_call.1} parent=1 // pred_region
      _
    $region13: #{tpu_custom_call.1} parent=1 // pred_fallthru
      _
    // Predicated region
    $region14: #{tpu_custom_call.1} parent=1 // pred_check
      _
    $region15: #{tpu_custom_call.1} parent=1 // pred_check_branch
      %36 = sbr.rel (0) target = $region17
    $region16: #{tpu_custom_call.1} parent=1 // pred_region
      %37 = dma.done [#allocation3], 128
    $region17: #{tpu_custom_call.1} parent=1 // pred_fallthru
      _
    // Predicated region
    $region18: #{tpu_custom_call.1} parent=1 // pred_check
      _
    $region19: #{tpu_custom_call.1} parent=1 // pred_check_branch
      %39 = sbr.rel (0) target = $region21
    $region20: #{tpu_custom_call.1} parent=1 // pred_region
      %40 = dma.done [#allocation6], 256
    $region21: #{tpu_custom_call.1} parent=1 // pred_fallthru
      _
    %v41 = vld [vmem:[#allocation2] sm:$0xff]
    %v42 = vld [vmem:[#allocation5] sm:$0xff]
    %v43 = vld [vmem:[#allocation5 + $0x8] sm:$0xff]
    %vm44 = vcmask 261120
    %v46 = vsel %vm44, %v41, 0
    %v49 = vsel %vm44, %v42, 0
    %v52 = vsel %vm44, %v43, 0
    %54 = vmatprep.subr.mxu0 0.0
    %55 = vmatpush1.xpose.msra.mxu0 %v49
    %56 = vmatprep.subr.mxu0 0.0
    %57 = vmatpush1.xpose.msra.mxu0 %v52
    %58 = vmatprep.subr.mxu0 0.0
    %59 = vmatpush1.xpose.msra.mxu0 0.0
    %60 = vmatprep.subr.mxu0 0.0
    %61 = vmatpush1.xpose.msra.mxu0 0.0
    %62 = vmatprep.subr.mxu0 0.0
    %63 = vmatpush1.xpose.msra.mxu0 0.0
    %64 = vmatprep.subr.mxu0 0.0
    %65 = vmatpush1.xpose.msra.mxu0 0.0
    %66 = vmatprep.subr.mxu0 0.0
    %67 = vmatpush1.xpose.msra.mxu0 0.0
    %68 = vmatprep.subr.mxu0 0.0
    %69 = vmatpush1.xpose.msra.mxu0 0.0
    %70 = vmatprep.subr.mxu0 0.0
    %71 = vmatpush1.xpose.msra.mxu0 0.0
    %72 = vmatprep.subr.mxu0 0.0
    %73 = vmatpush1.xpose.msra.mxu0 0.0
    %74 = vmatprep.subr.mxu0 0.0
    %75 = vmatpush1.xpose.msra.mxu0 0.0
    %76 = vmatprep.subr.mxu0 0.0
    %77 = vmatpush1.xpose.msra.mxu0 0.0
    %78 = vmatprep.subr.mxu0 0.0
    %79 = vmatpush1.xpose.msra.mxu0 0.0
    %80 = vmatprep.subr.mxu0 0.0
    %81 = vmatpush1.xpose.msra.mxu0 0.0
    %82 = vmatprep.subr.mxu0 0.0
    %83 = vmatpush1.xpose.msra.mxu0 0.0
    %84 = vmatprep.subr.mxu0 0.0
    %85 = vmatpush1.xpose.msra.mxu0 0.0
    %86 = vmatprep.subr.mxu0 0.0
    %87 = vmatpush1.xpose.msra.mxu0 0.0
    %88 = vmatprep.subr.mxu0 0.0
    %89 = vmatpush1.xpose.msra.mxu0 0.0
    %90 = vmatprep.subr.mxu0 0.0
    %91 = vmatpush1.xpose.msra.mxu0 0.0
    %92 = vmatprep.subr.mxu0 0.0
    %93 = vmatpush1.xpose.msra.mxu0 0.0
    %94 = vmatprep.subr.mxu0 0.0
    %95 = vmatpush1.xpose.msra.mxu0 0.0
    %96 = vmatprep.subr.mxu0 0.0
    %97 = vmatpush1.xpose.msra.mxu0 0.0
    %98 = vmatprep.subr.mxu0 0.0
    %99 = vmatpush1.xpose.msra.mxu0 0.0
    %100 = vmatprep.subr.mxu0 0.0
    %101 = vmatpush1.xpose.msra.mxu0 0.0
    %102 = vmatprep.subr.mxu0 0.0
    %103 = vmatpush1.xpose.msra.mxu0 0.0
    %104 = vmatprep.subr.mxu0 0.0
    %105 = vmatpush1.xpose.msra.mxu0 0.0
    %106 = vmatprep.subr.mxu0 0.0
    %107 = vmatpush1.xpose.msra.mxu0 0.0
    %108 = vmatprep.subr.mxu0 0.0
    %109 = vmatpush1.xpose.msra.mxu0 0.0
    %110 = vmatprep.subr.mxu0 0.0
    %111 = vmatpush1.xpose.msra.mxu0 0.0
    %112 = vmatprep.subr.mxu0 0.0
    %113 = vmatpush1.xpose.msra.mxu0 0.0
    %114 = vmatprep.subr.mxu0 0.0
    %115 = vmatpush1.xpose.msra.mxu0 0.0
    %116 = vmatprep.subr.mxu0 0.0
    %117 = vmatpush1.xpose.msra.mxu0 0.0
    %118 = vmatprep.mubr.f32.mxu0 0.0
    %119 = vmatmul.mubr.f32.gmra.mrb[0].mxu0 %v46
    %v120 = vpop.f32.mrb[0].mxu0
    %v121 = vadd.f32 0.0, %v120
    %v122 = vpop.f32.mrb[0].mxu0
    %123 = vdwg.mxu0
    %v124 = vld [vmem:[%s2] sm:$0x1]
    %v126 = vlaneseq
    %v127 = vshrl.u32 %v126, 7
    %v128 = vsub.s32 0, %v127
    %v129 = vrot.slane %v124, %v128
    %v131 = vmul.f32 %v121, %v129
    %vm132 = vcmask 130048
    %133 = vst.msk [vmem:[#allocation7] sm:$0xff] %vm132, %v131
    // Predicated region
    $region22: #{tpu_custom_call.1} parent=1 // pred_check
      _
    $region23: #{tpu_custom_call.1} parent=1 // pred_check_branch
      %135 = sbr.rel (0) target = $region25
    $region24: #{tpu_custom_call.1} parent=1 // pred_region
      %s137 = ssub.s32 128, 128
      %138 = vsyncadd [#allocation4], %s137
      %s140 = sshll.u32 [#allocation7], 4
      %s141 = int_to_ptr.vmem [resolvable:$true] %s140
      %143 = dma.vmem_to_hbm [thread:$0]  %s141, 128, %s3, [#allocation4]
    $region25: #{tpu_custom_call.1} parent=1 // pred_fallthru
      _
    // Predicated region
    $region26: #{tpu_custom_call.1} parent=1 // pred_check
      _
    $region27: #{tpu_custom_call.1} parent=1 // pred_check_branch
      %145 = sbr.rel (0) target = $region29
    $region28: #{tpu_custom_call.1} parent=1 // pred_region
      %146 = dma.done [#allocation4], 128
    $region29: #{tpu_custom_call.1} parent=1 // pred_fallthru
      _
    %147 = vsyncpa [#allocation3], 1
    %148 = vsyncpa [#allocation6], 1
    %149 = vsyncpa [#allocation4], 1

</llo_original>
